<compile_context>
chip_gen: v6e
topology: v6e:2x2x1
jax: 0.10.0
libtpu: 0.0.40
codegen_flags: <defaults>
</compile_context>

<pallas_src>
import functools

import jax
import jax.numpy as jnp
from jax.experimental import pallas as pl
from jax.experimental.pallas import tpu as pltpu

EPS = 1e-5  # nn.LayerNorm default


def _round_up(n, m):
    return ((n + m - 1) // m) * m


def prenorm_kernel(x_ref, gamma_ref, beta_ref, w_ref, b_ref, o_ref):
    # x_ref: (tile_rows, D) block of the flattened (rows_padded, D) input.
    x = x_ref[...].astype(jnp.float32)

    # LayerNorm over the embed dim — biased variance, f32 stats (PyTorch-like).
    mean = jnp.mean(x, axis=-1, keepdims=True)
    centered = x - mean
    var = jnp.mean(centered * centered, axis=-1, keepdims=True)
    xhat = centered * jax.lax.rsqrt(var + EPS)
    y = xhat * gamma_ref[...] + beta_ref[...]          # (tile_rows, D) f32

    # fn = Linear(D, D_out): feed the MXU bf16 LHS/RHS, accumulate in f32.
    out = jnp.dot(
        y.astype(jnp.bfloat16),
        w_ref[...],                                    # bf16 (D, D_out_padded)
        preferred_element_type=jnp.float32,
    )
    out = out + b_ref[...]                             # f32 bias add
    o_ref[...] = out.astype(o_ref.dtype)


@functools.partial(jax.jit, static_argnames=("tile_rows",))
def prenorm_forward(x, gamma, beta, w_t, b, *, tile_rows=256):
    B, S, D = x.shape
    D_out = w_t.shape[1]
    rows = B * S

    # --- tiling / padding (all Python ints at trace time) -----------------
    tr = min(tile_rows, _round_up(rows, 8))            # sublane-aligned tile
    rows_p = _round_up(rows, tr)                       # pad rows to tile mult
    dout_p = _round_up(D_out, 128)                     # lane-dense output dim
    grid = (rows_p // tr,)

    x2 = x.reshape(rows, D)
    if rows_p != rows:
        x2 = jnp.pad(x2, ((0, rows_p - rows), (0, 0)))
    gamma2 = gamma.reshape(1, D).astype(jnp.float32)
    beta2 = beta.reshape(1, D).astype(jnp.float32)

    w_p = w_t
    b_p = b
    if dout_p != D_out:
        w_p = jnp.pad(w_p, ((0, 0), (0, dout_p - D_out)))
        b_p = jnp.pad(b_p, ((0, dout_p - D_out),))
    w_p = w_p.astype(jnp.bfloat16)                     # bf16 MXU weights
    b_p = b_p.reshape(1, dout_p).astype(jnp.float32)

    # --- VMEM budget (double-buffered x/out tiles + resident weight) ------
    vmem_bytes = (2 * tr * D * 4            # x tiles (f32, double buffered)
                  + 2 * tr * dout_p * 4     # out tiles (f32, double buffered)
                  + D * dout_p * 2          # bf16 weight, resident
                  + (2 * D + dout_p) * 4)   # gamma/beta/bias
    vmem_limit = int(min(max(2 * vmem_bytes, 32 * 1024 * 1024),
                         100 * 1024 * 1024))

    cost = pl.CostEstimate(
        flops=2 * rows_p * D * dout_p + 6 * rows_p * D,
        transcendentals=rows_p,
        bytes_accessed=(rows_p * D * 4 + D * dout_p * 2
                        + rows_p * dout_p * 4 + (2 * D + dout_p) * 4),
    )

    out2 = pl.pallas_call(
        prenorm_kernel,
        out_shape=jax.ShapeDtypeStruct((rows_p, dout_p), x.dtype),
        grid_spec=pltpu.PrefetchScalarGridSpec(
            num_scalar_prefetch=0,
            grid=grid,
            in_specs=[
                pl.BlockSpec((tr, D), lambda i: (i, 0)),        # x tile
                pl.BlockSpec((1, D), lambda i: (0, 0)),         # gamma
                pl.BlockSpec((1, D), lambda i: (0, 0)),         # beta
                pl.BlockSpec((D, dout_p), lambda i: (0, 0)),    # W^T (bf16)
                pl.BlockSpec((1, dout_p), lambda i: (0, 0)),    # bias
            ],
            out_specs=pl.BlockSpec((tr, dout_p), lambda i: (i, 0)),
        ),
        compiler_params=pltpu.CompilerParams(
            dimension_semantics=("parallel",),
            vmem_limit_bytes=vmem_limit,
        ),
        cost_estimate=cost,
    )(x2, gamma2, beta2, w_p, b_p)

    return out2[:rows, :D_out].reshape(B, S, D_out)


def reference_forward(x, gamma, beta, w_t, b):
    # Pure-JAX f32 reference of PreNorm(LayerNorm -> Linear).
    xf = x.astype(jnp.float32)
    mean = jnp.mean(xf, axis=-1, keepdims=True)
    var = jnp.mean((xf - mean) ** 2, axis=-1, keepdims=True)
    xhat = (xf - mean) * jax.lax.rsqrt(var + EPS)
    y = xhat * gamma + beta
    return (y @ w_t + b).astype(x.dtype)


if __name__ == "__main__":
    B, S, D = 2, 8, 32  # batch, seq, embed_dim

    key = jax.random.PRNGKey(0)
    kx, kw, kb = jax.random.split(key, 3)

    x = jax.random.normal(kx, (B, S, D), dtype=jnp.float32)

    # LayerNorm params: PyTorch default init (gamma=1, beta=0).
    gamma = jnp.ones((D,), dtype=jnp.float32)
    beta = jnp.zeros((D,), dtype=jnp.float32)

    # fn = Linear(D, D): deterministic init; stored pre-transposed (in, out).
    D_out = D
    w_t = jax.random.normal(kw, (D, D_out), dtype=jnp.float32) * 0.02
    b = jax.random.normal(kb, (D_out,), dtype=jnp.float32) * 0.02

    out = prenorm_forward(x, gamma, beta, w_t, b)
    out = jax.block_until_ready(out)

    ref = reference_forward(x, gamma, beta, w_t, b)
    assert out.shape == (B, S, D_out)
    # bf16 MXU inputs vs f32 reference -> ~1e-2 relative tolerance.
    assert jnp.allclose(out, ref, atol=1e-2, rtol=2e-2), "mismatch vs reference"

    print("KERNEL_OK")
</pallas_src>

<mosaic_0001>
module attributes {stable_mosaic.version = 11 : i64} {
  func.func @prenorm_kernel(%arg0: i32, %arg1: memref<16x32xf32, #tpu.memory_space<vmem>>, %arg2: memref<1x32xf32, #tpu.memory_space<vmem>>, %arg3: memref<1x32xf32, #tpu.memory_space<vmem>>, %arg4: memref<32x128xbf16, #tpu.memory_space<vmem>>, %arg5: memref<1x128xf32, #tpu.memory_space<vmem>>, %arg6: memref<16x128xf32, #tpu.memory_space<vmem>>) attributes {dimension_semantics = [#tpu.dimension_semantics<parallel>], iteration_bounds = array<i64: 1>, scalar_prefetch = 0 : i64, scratch_operands = 0 : i64, tpu.core_type = #tpu.core_type<tc>, window_params = [{transform_indices = @transform_0, window_bounds = array<i64: 16, 32>}, {pipeline_mode = #tpu.pipeline_mode<synchronous>, transform_indices = @transform_1, window_bounds = array<i64: 1, 32>}, {pipeline_mode = #tpu.pipeline_mode<synchronous>, transform_indices = @transform_2, window_bounds = array<i64: 1, 32>}, {pipeline_mode = #tpu.pipeline_mode<synchronous>, transform_indices = @transform_3, window_bounds = array<i64: 32, 128>}, {pipeline_mode = #tpu.pipeline_mode<synchronous>, transform_indices = @transform_4, window_bounds = array<i64: 1, 128>}, {transform_indices = @transform_5, window_bounds = array<i64: 16, 128>}]} {
    %c0 = arith.constant 0 : index
    %c0_0 = arith.constant 0 : index
    %0 = vector.load %arg1[%c0, %c0_0] : memref<16x32xf32, #tpu.memory_space<vmem>>, vector<16x32xf32>
    %cst = arith.constant dense<0.000000e+00> : vector<16xf32>
    %1 = vector.multi_reduction <add>, %0, %cst [1] : vector<16x32xf32> to vector<16xf32>
    %2 = vector.shape_cast %1 : vector<16xf32> to vector<16x1xf32>
    %cst_1 = arith.constant 3.200000e+01 : f32
    %3 = vector.broadcast %cst_1 : f32 to vector<16x1xf32>
    %4 = arith.divf %2, %3 : vector<16x1xf32>
    %5 = vector.broadcast %4 : vector<16x1xf32> to vector<16x32xf32>
    %6 = arith.subf %0, %5 : vector<16x32xf32>
    %7 = arith.mulf %6, %6 : vector<16x32xf32>
    %cst_2 = arith.constant dense<0.000000e+00> : vector<16xf32>
    %8 = vector.multi_reduction <add>, %7, %cst_2 [1] : vector<16x32xf32> to vector<16xf32>
    %9 = vector.shape_cast %8 : vector<16xf32> to vector<16x1xf32>
    %cst_3 = arith.constant 3.200000e+01 : f32
    %10 = vector.broadcast %cst_3 : f32 to vector<16x1xf32>
    %11 = arith.divf %9, %10 : vector<16x1xf32>
    %cst_4 = arith.constant 9.99999974E-6 : f32
    %12 = vector.broadcast %cst_4 : f32 to vector<16x1xf32>
    %13 = arith.addf %11, %12 : vector<16x1xf32>
    %14 = math.rsqrt %13 : vector<16x1xf32>
    %15 = vector.broadcast %14 : vector<16x1xf32> to vector<16x32xf32>
    %16 = arith.mulf %6, %15 : vector<16x32xf32>
    %c0_5 = arith.constant 0 : index
    %c0_6 = arith.constant 0 : index
    %17 = vector.load %arg2[%c0_5, %c0_6] : memref<1x32xf32, #tpu.memory_space<vmem>>, vector<1x32xf32>
    %18 = vector.broadcast %17 : vector<1x32xf32> to vector<16x32xf32>
    %19 = arith.mulf %16, %18 : vector<16x32xf32>
    %c0_7 = arith.constant 0 : index
    %c0_8 = arith.constant 0 : index
    %20 = vector.load %arg3[%c0_7, %c0_8] : memref<1x32xf32, #tpu.memory_space<vmem>>, vector<1x32xf32>
    %21 = vector.broadcast %20 : vector<1x32xf32> to vector<16x32xf32>
    %22 = arith.addf %19, %21 : vector<16x32xf32>
    %23 = arith.truncf %22 : vector<16x32xf32> to vector<16x32xbf16>
    %c0_9 = arith.constant 0 : index
    %c0_10 = arith.constant 0 : index
    %24 = vector.load %arg4[%c0_9, %c0_10] : memref<32x128xbf16, #tpu.memory_space<vmem>>, vector<32x128xbf16>
    %cst_11 = arith.constant dense<0.000000e+00> : vector<16x128xf32>
    %25 = tpu.matmul %23, %24, %cst_11 {dimension_numbers = #tpu.dot_dimension_numbers<[1], [0], [0], [1], [0, 0, 1, 1], [], []>} : vector<16x32xbf16>, vector<32x128xbf16>, vector<16x128xf32> -> vector<16x128xf32>
    %c0_12 = arith.constant 0 : index
    %c0_13 = arith.constant 0 : index
    %26 = vector.load %arg5[%c0_12, %c0_13] : memref<1x128xf32, #tpu.memory_space<vmem>>, vector<1x128xf32>
    %27 = vector.broadcast %26 : vector<1x128xf32> to vector<16x128xf32>
    %28 = arith.addf %25, %27 : vector<16x128xf32>
    %c0_14 = arith.constant 0 : index
    %c0_15 = arith.constant 0 : index
    %29 = vector.load %arg6[%c0_14, %c0_15] : memref<16x128xf32, #tpu.memory_space<vmem>>, vector<16x128xf32>
    tpu.vector_store %arg6[%c0_14, %c0_15], %28 {strides = array<i32>} : memref<16x128xf32, #tpu.memory_space<vmem>>, vector<16x128xf32>,
    return
  }
  func.func @transform_0(%arg0: i32) -> (i32, i32) {
    %c0_i32 = arith.constant 0 : i32
    %c0_i32_0 = arith.constant 0 : i32
    return %arg0, %c0_i32 : i32, i32
  }
  func.func @transform_1(%arg0: i32) -> (i32, i32) {
    %c0_i32 = arith.constant 0 : i32
    %c0_i32_0 = arith.constant 0 : i32
    %c0_i32_1 = arith.constant 0 : i32
    return %c0_i32, %c0_i32_0 : i32, i32
  }
  func.func @transform_2(%arg0: i32) -> (i32, i32) {
    %c0_i32 = arith.constant 0 : i32
    %c0_i32_0 = arith.constant 0 : i32
    %c0_i32_1 = arith.constant 0 : i32
    return %c0_i32, %c0_i32_0 : i32, i32
  }
  func.func @transform_3(%arg0: i32) -> (i32, i32) {
    %c0_i32 = arith.constant 0 : i32
    %c0_i32_0 = arith.constant 0 : i32
    %c0_i32_1 = arith.constant 0 : i32
    return %c0_i32, %c0_i32_0 : i32, i32
  }
  func.func @transform_4(%arg0: i32) -> (i32, i32) {
    %c0_i32 = arith.constant 0 : i32
    %c0_i32_0 = arith.constant 0 : i32
    %c0_i32_1 = arith.constant 0 : i32
    return %c0_i32, %c0_i32_0 : i32, i32
  }
  func.func @transform_5(%arg0: i32) -> (i32, i32) {
    %c0_i32 = arith.constant 0 : i32
    %c0_i32_0 = arith.constant 0 : i32
    return %arg0, %c0_i32 : i32, i32
  }
}

</mosaic_0001>

<llo_original>
// kernel: prenorm_forward.1
$region0: #{prenorm_forward.1}
  #allocation0 [shape = 'u32[]', space=smem, size = 0x4, offset = 0x4, fixed_abs, tag = 'smem constant byte address 0x4 - core index']
  #allocation1 [shape = 'u32[144,128]{1,0:T(1,128)}', space=vmem, size = 0x12000, scoped, tag = 'internal scratch']
  %s0 = inlined_call_operand.vmem [shape: f32[16,32], index: 0, kind: input, shape index: {}]
  %s1 = inlined_call_operand.vmem [shape: f32[1,32], index: 1, kind: input, shape index: {}]
  %s2 = inlined_call_operand.vmem [shape: f32[1,32], index: 2, kind: input, shape index: {}]
  %s3 = inlined_call_operand.vmem [shape: bf16[32,128], index: 3, kind: input, shape index: {}]
  %s4 = inlined_call_operand.vmem [shape: f32[1,128], index: 4, kind: input, shape index: {}]
  %s5 = inlined_call_operand.vmem [shape: f32[16,128], index: 5, kind: output, shape index: {}]
  %s6 = sld [smem:[#allocation0]]
  $region30: #{prenorm_forward.1} parent=0
    _
  %s8 = ssub.s32 1, %s6
  %s9 = scalar_select 0, %s8, %s6
  // Predicated region
  $region2: #{prenorm_forward.1} parent=0 // pred_check
    _
  $region3: #{prenorm_forward.1} parent=0 // pred_check_branch
    %11 = sbr.rel (0) target = $region5
  $region4: #{prenorm_forward.1} parent=0 // pred_region
    _
  $region5: #{prenorm_forward.1} parent=0 // pred_fallthru
    _
  // Predicated region
  $region6: #{prenorm_forward.1} parent=0 // pred_check
    _
  $region7: #{prenorm_forward.1} parent=0 // pred_check_branch
    %13 = sbr.rel (0) target = $region9
  $region8: #{prenorm_forward.1} parent=0 // pred_region
    _
  $region9: #{prenorm_forward.1} parent=0 // pred_fallthru
    _
  // Predicated region
  $region10: #{prenorm_forward.1} parent=0 // pred_check
    _
  $region11: #{prenorm_forward.1} parent=0 // pred_check_branch
    %15 = sbr.rel (0) target = $region13
  $region12: #{prenorm_forward.1} parent=0 // pred_region
    _
  $region13: #{prenorm_forward.1} parent=0 // pred_fallthru
    _
  // Predicated region
  $region14: #{prenorm_forward.1} parent=0 // pred_check
    _
  $region15: #{prenorm_forward.1} parent=0 // pred_check_branch
    %17 = sbr.rel (0) target = $region17
  $region16: #{prenorm_forward.1} parent=0 // pred_region
    _
  $region17: #{prenorm_forward.1} parent=0 // pred_fallthru
    _
  // Predicated region
  $region18: #{prenorm_forward.1} parent=0 // pred_check
    _
  $region19: #{prenorm_forward.1} parent=0 // pred_check_branch
    %19 = sbr.rel (0) target = $region21
  $region20: #{prenorm_forward.1} parent=0 // pred_region
    _
  $region21: #{prenorm_forward.1} parent=0 // pred_fallthru
    _
  %v21 = vld [vmem:[%s0] sm:$0xff]
  %v22 = vld [vmem:[%s0 + $0x8] sm:$0xff]
  %vm23 = vcmask 261120
  %v24 = vsel %vm23, %v21, 0.0
  %25 = vadd.xlane.f32.xlu0 %v24
  %v26 = vpop.xlane.xlu0 %25
  %v27 = vsel %vm23, %v22, 0.0
  %28 = vadd.xlane.f32.xlu0 %v27
  %v29 = vpop.xlane.xlu0 %28
  %v30 = vrcp.pop 32.0
  %v31 = vmul.f32 %v26, %v30
  %v32 = vmul.f32 %v29, %v30
  %v33 = vsub.f32 %v21, %v31
  %v34 = vsub.f32 %v22, %v32
  %v35 = vmul.f32 %v33, %v33
  %v36 = vmul.f32 %v34, %v34
  %v37 = vsel %vm23, %v35, 0.0
  %38 = vadd.xlane.f32.xlu0 %v37
  %v39 = vpop.xlane.xlu0 %38
  %v40 = vsel %vm23, %v36, 0.0
  %41 = vadd.xlane.f32.xlu0 %v40
  %v42 = vpop.xlane.xlu0 %41
  %v43 = vmul.f32 %v39, %v30
  %v44 = vmul.f32 %v42, %v30
  %v45 = vadd.f32 %v43, 1e-05
  %v46 = vadd.f32 %v44, 1e-05
  %v47 = vrsqrt.pop %v45
  %v48 = vrsqrt.pop %v46
  %v49 = vmul.f32 %v33, %v47
  %v50 = vmul.f32 %v34, %v48
  %v51 = vld [vmem:[%s1] sm:$0x1]
  %v53 = vlaneseq
  %v54 = vshrl.u32 %v53, 7
  %v55 = vsub.s32 0, %v54
  %v56 = vrot.slane %v51, %v55
  %v58 = vmul.f32 %v49, %v56
  %v59 = vmul.f32 %v50, %v56
  %v60 = vld [vmem:[%s2] sm:$0x1]
  %v62 = vlaneseq
  %v63 = vshrl.u32 %v62, 7
  %v64 = vsub.s32 0, %v63
  %v65 = vrot.slane %v60, %v64
  %v67 = vadd.f32 %v58, %v65
  %v68 = vadd.f32 %v59, %v65
  %v69 = vpack.c.bf16 %v68, %v67
  %v70 = vld [vmem:[%s3] sm:$0xf]
  %v71 = vld [vmem:[%s3 + $0x4] sm:$0xf]
  %v72 = vld [vmem:[%s3 + $0x8] sm:$0xf]
  %v73 = vld [vmem:[%s3 + $0xc] sm:$0xf]
  %v74 = vld [vmem:[%s4] sm:$0x1]
  %v76 = vlaneseq
  %v77 = vshrl.u32 %v76, 7
  %v78 = vsub.s32 0, %v77
  %v79 = vrot.slane %v74, %v78
  %v85 = vunpack.c.l.b16 %v70
  %v86 = vunpack.c.l.b16 %v71
  %v87 = vunpack.c.l.b16 %v72
  %v88 = vunpack.c.l.b16 %v73
  %v89 = vpack.c.b16 %v86, %v85
  %v90 = vpack.c.b16 %v88, %v87
  %v94 = vsel %vm23, %v69, 0
  %96 = vmatprep.subr.bf16.mxu0 0
  %97 = vmatpush1.bf16.msra.mxu0 0
  %98 = vmatprep.subr.bf16.mxu0 0
  %99 = vmatpush1.bf16.msra.mxu0 0
  %100 = vmatprep.subr.bf16.mxu0 0
  %101 = vmatpush1.bf16.msra.mxu0 0
  %102 = vmatprep.subr.bf16.mxu0 0
  %103 = vmatpush1.bf16.msra.mxu0 0
  %104 = vmatprep.subr.bf16.mxu0 0
  %105 = vmatpush1.bf16.msra.mxu0 0
  %106 = vmatprep.subr.bf16.mxu0 0
  %107 = vmatpush1.bf16.msra.mxu0 0
  %108 = vmatprep.subr.bf16.mxu0 0
  %109 = vmatpush1.bf16.msra.mxu0 %v90
  %110 = vmatprep.subr.bf16.mxu0 0
  %111 = vmatpush1.bf16.msra.mxu0 %v89
  %112 = vmatprep.subr.bf16.mxu0 0
  %113 = vmatpush2.bf16.msra.mxu0 0
  %114 = vmatprep.subr.bf16.mxu0 0
  %115 = vmatpush2.bf16.msra.mxu0 0
  %116 = vmatprep.subr.bf16.mxu0 0
  %117 = vmatpush2.bf16.msra.mxu0 0
  %118 = vmatprep.subr.bf16.mxu0 0
  %119 = vmatpush2.bf16.msra.mxu0 0
  %120 = vmatprep.subr.bf16.mxu0 0
  %121 = vmatpush2.bf16.msra.mxu0 0
  %122 = vmatprep.subr.bf16.mxu0 0
  %123 = vmatpush2.bf16.msra.mxu0 0
  %124 = vmatprep.subr.bf16.mxu0 0
  %125 = vmatpush2.bf16.msra.mxu0 0
  %126 = vmatprep.subr.bf16.mxu0 0
  %127 = vmatpush2.bf16.msra.mxu0 0
  %128 = vmatprep.mubr.bf16.mxu0 0
  %129 = vmatmul.mubr.bf16.gmra.mxu0 %v94
  %v130 = vpop.f32.mrf.mxu0
  %v131 = vadd.f32 %v79, %v130
  %v132 = vpop.f32.mrf.mxu0
  %v133 = vpop.f32.mrf.mxu0
  %v134 = vadd.f32 %v79, %v133
  %v135 = vpop.f32.mrf.mxu0
  %136 = vdwg.mxu0
  %137 = vst [vmem:[%s5] sm:$0xff] %v131
  %138 = vst [vmem:[%s5 + $0x8] sm:$0xff] %v134
  // Predicated region
  $region22: #{prenorm_forward.1} parent=0 // pred_check
    _
  $region23: #{prenorm_forward.1} parent=0 // pred_check_branch
    %140 = sbr.rel (0) target = $region25
  $region24: #{prenorm_forward.1} parent=0 // pred_region
    _
  $region25: #{prenorm_forward.1} parent=0 // pred_fallthru
    _
  // Predicated region
  $region26: #{prenorm_forward.1} parent=0 // pred_check
    _
  $region27: #{prenorm_forward.1} parent=0 // pred_check_branch
    %142 = sbr.rel (0) target = $region29
  $region28: #{prenorm_forward.1} parent=0 // pred_region
    _
  $region29: #{prenorm_forward.1} parent=0 // pred_fallthru
    _

</llo_original>
